<compile_context>
chip_gen: v5e
topology: v5e:2x2
jax: 0.10.0
libtpu: 0.0.40
codegen_flags: <defaults>
</compile_context>

<pallas_src>
import jax
import jax.numpy as jnp
from jax.experimental import pallas as pl
from jax.experimental.pallas import tpu as pltpu


def _skip_dma_copy_kernel(x_ref, o_ref, sems):
    """DMA-only HBM->HBM copy: start all chunk copies, then wait on all."""
    n_chunks = x_ref.shape[0]  # static
    copies = [
        pltpu.make_async_copy(x_ref.at[c], o_ref.at[c], sems.at[c])
        for c in range(n_chunks)
    ]
    for cp in copies:
        cp.start()
    for cp in copies:
        cp.wait()


def _pick_num_chunks(total_elems: int, itemsize: int) -> int:
    """Split very large tensors into a few in-flight DMAs; 1 otherwise.

    Only chunk counts that divide the flat size are considered, so there is
    never a ragged tail; 1 is always a legal fallback.
    """
    min_chunk_bytes = 1 << 20  # keep each DMA at least ~1 MiB
    for cand in (8, 4, 2):
        if total_elems % cand == 0 and (total_elems // cand) * itemsize >= min_chunk_bytes:
            return cand
    return 1


def skip_pallas_copy(x: jax.Array) -> jax.Array:
    """Identity implemented as a DMA-only HBM->HBM copy on TPU."""
    if x.size == 0:
        return x

    total = int(x.size)
    itemsize = jnp.dtype(x.dtype).itemsize
    nc = _pick_num_chunks(total, itemsize)
    chunk = total // nc

    # Contiguous flatten to (nc, chunk): no pad, no data movement.
    x2d = x.reshape(nc, chunk)

    out2d = pl.pallas_call(
        _skip_dma_copy_kernel,
        out_shape=jax.ShapeDtypeStruct((nc, chunk), x.dtype),
        in_specs=[pl.BlockSpec(memory_space=pl.ANY)],
        out_specs=pl.BlockSpec(memory_space=pl.ANY),
        scratch_shapes=[pltpu.SemaphoreType.DMA((nc,))],
        cost_estimate=pl.CostEstimate(
            flops=0,
            transcendentals=0,
            bytes_accessed=2 * total * itemsize,
        ),
    )(x2d)

    return out2d.reshape(x.shape)


def skip_(x: jax.Array, *, materialize: bool = False) -> jax.Array:
    """Forward of Skip_ (identity).

    Hot path: return the input unchanged — zero kernel launches, zero HBM
    traffic. Set materialize=True to force a fresh output buffer via the
    DMA-only Pallas copy kernel.
    """
    if not materialize:
        return x
    return skip_pallas_copy(x)


if __name__ == "__main__":
    key = jax.random.PRNGKey(0)
    # Small NCHW input consistent with an FPN-style feature map.
    x = jax.random.normal(key, (2, 4, 16, 16), dtype=jnp.float32)

    # Hot path: true identity, no kernel launch.
    y_fast = skip_(x)
    assert y_fast is x

    # DMA-copy path: run once on TPU and validate.
    y = jax.block_until_ready(skip_(x, materialize=True))

    assert y.shape == x.shape and y.dtype == x.dtype
    assert bool(jnp.array_equal(y, x))
    print("KERNEL_OK")
</pallas_src>

<mosaic_0001>
module attributes {stable_mosaic.version = 11 : i64} {
  func.func @_skip_dma_copy_kernel(%arg0: memref<1x2048xf32, #tpu.memory_space<any>>, %arg1: memref<1x2048xf32, #tpu.memory_space<any>>, %arg2: memref<1x!tpu.dma_semaphore, #tpu.memory_space<semaphore_mem>>) attributes {dimension_semantics = [], scalar_prefetch = 0 : i64, scratch_operands = 1 : i64, tpu.core_type = #tpu.core_type<tc>} {
    %c0_i32 = arith.constant 0 : i32
    %c0_i32_0 = arith.constant 0 : i32
    %c0_i32_1 = arith.constant 0 : i32
    %c0_i32_2 = arith.constant 0 : i32
    %0 = tpu.memref_slice %arg0[%c0_i32, %c0_i32_2] : memref<1x2048xf32, #tpu.memory_space<any>> -> memref<1x2048xf32, #tpu.memory_space<any>>
    %1 = tpu.memref_squeeze %0 : memref<1x2048xf32, #tpu.memory_space<any>> -> memref<2048xf32, #tpu.memory_space<any>>
    %c0_i32_3 = arith.constant 0 : i32
    %2 = tpu.memref_slice %arg1[%c0_i32_0, %c0_i32_3] : memref<1x2048xf32, #tpu.memory_space<any>> -> memref<1x2048xf32, #tpu.memory_space<any>>
    %3 = tpu.memref_squeeze %2 : memref<1x2048xf32, #tpu.memory_space<any>> -> memref<2048xf32, #tpu.memory_space<any>>
    %4 = tpu.memref_slice %arg2[%c0_i32_1] : memref<1x!tpu.dma_semaphore, #tpu.memory_space<semaphore_mem>> -> memref<1x!tpu.dma_semaphore, #tpu.memory_space<semaphore_mem>>
    %5 = tpu.memref_squeeze %4 : memref<1x!tpu.dma_semaphore, #tpu.memory_space<semaphore_mem>> -> memref<!tpu.dma_semaphore, #tpu.memory_space<semaphore_mem>>
    tpu.enqueue_dma source(%1 : memref<2048xf32, #tpu.memory_space<any>>) target(%3 : memref<2048xf32, #tpu.memory_space<any>>) target_semaphore(%5 : memref<!tpu.dma_semaphore, #tpu.memory_space<semaphore_mem>>)
    %c0_i32_4 = arith.constant 0 : i32
    %c0_i32_5 = arith.constant 0 : i32
    %c0_i32_6 = arith.constant 0 : i32
    %c0_i32_7 = arith.constant 0 : i32
    %6 = tpu.memref_slice %arg0[%c0_i32_4, %c0_i32_7] : memref<1x2048xf32, #tpu.memory_space<any>> -> memref<1x2048xf32, #tpu.memory_space<any>>
    %7 = tpu.memref_squeeze %6 : memref<1x2048xf32, #tpu.memory_space<any>> -> memref<2048xf32, #tpu.memory_space<any>>
    %c0_i32_8 = arith.constant 0 : i32
    %8 = tpu.memref_slice %arg1[%c0_i32_5, %c0_i32_8] : memref<1x2048xf32, #tpu.memory_space<any>> -> memref<1x2048xf32, #tpu.memory_space<any>>
    %9 = tpu.memref_squeeze %8 : memref<1x2048xf32, #tpu.memory_space<any>> -> memref<2048xf32, #tpu.memory_space<any>>
    %10 = tpu.memref_slice %arg2[%c0_i32_6] : memref<1x!tpu.dma_semaphore, #tpu.memory_space<semaphore_mem>> -> memref<1x!tpu.dma_semaphore, #tpu.memory_space<semaphore_mem>>
    %11 = tpu.memref_squeeze %10 : memref<1x!tpu.dma_semaphore, #tpu.memory_space<semaphore_mem>> -> memref<!tpu.dma_semaphore, #tpu.memory_space<semaphore_mem>>
    tpu.wait_dma2 semaphore(%11 : memref<!tpu.dma_semaphore, #tpu.memory_space<semaphore_mem>>) src(%7 : memref<2048xf32, #tpu.memory_space<any>>) dst(%9 : memref<2048xf32, #tpu.memory_space<any>>)
    return
  }
}

</mosaic_0001>

<llo_original>
// kernel: tpu_custom_call.1
$region0: #{tpu_custom_call.1}
  #allocation0 [shape = 'u32[]', space=smem, size = 0x4, offset = 0x4, fixed_abs, tag = 'smem constant byte address 0x4 - core index']
  #allocation1 [shape = 'u32[72,128]{1,0:T(1,128)}', space=vmem, size = 0x9000, scoped, tag = 'internal scratch']
  #allocation2 [shape = 's32[1]{0}', space=sflag, size = 0x4, scoped, tag = 'scratch operand']
  #allocation3 [shape = 's32[]', space=sflag, size = 0x4, offset = 0, fixed_abs, tag = 'sflag constant byte address 0x0 - dummy sync flag']
  #allocation4 [shape = 'u32[0]{0}', space=smem, size = 0, offset = 0, fixed_abs, tag = 'smem constant byte address 0x0 - null']
  %s0 = inlined_call_operand.hbm [shape: f32[1,2048], index: 0, kind: input, shape index: {}]
  %s1 = inlined_call_operand.hbm [shape: f32[1,2048], index: 1, kind: output, shape index: {}]
  %s2 = sld [smem:[#allocation0]]
  $region2: #{tpu_custom_call.1} parent=0
    _
  %s4 = ssub.s32 1, %s2
  %s5 = scalar_select 0, %s4, %s2
  %s7 = sshll.u32 1, 14
  %s8 = sxor.u32 4294967295, %s7
  %s10 = sshll.u32 %s0, 4
  %s11 = int_to_ptr.hbm [resolvable:$true] %s10
  %s12 = sshll.u32 %s1, 4
  %s13 = int_to_ptr.hbm [resolvable:$true] %s12
  %16 = dma.general %s11, 256, %s13, [#allocation2], [#allocation3], [#allocation4], 0, 0
  %18 = dma.done [#allocation2], 256
  %19 = vsyncmov [#allocation2]
  %s20 = vpop.sfrf %19
  %p21 = scmp.eq.s32.totalorder %s20, 0
  %p22 = pneg %p21
  %24 = shalt.err (%p22)

</llo_original>
